<compile_context>
chip_gen: v5e
topology: v5e:2x2
jax: 0.10.0
libtpu: 0.0.40
codegen_flags: <defaults>
</compile_context>

<pallas_src>
import jax
import jax.numpy as jnp
from jax.experimental import pallas as pl
from jax.experimental.pallas import tpu as pltpu

# ---- LSNNParameters defaults (norse) ----
TAU_SYN_INV = 1.0 / 5e-3
TAU_MEM_INV = 1.0 / 1e-2
TAU_ADAPT_INV = 1.0 / 700.0
V_LEAK = 0.0
V_TH = 1.0
V_RESET = 0.0
BETA = 1.8
DT = 0.001
# TODO(synk): surrogate-gradient ("super", alpha=100) only affects backward; forward is Heaviside.


def _round_up(x: int, m: int) -> int:
    return ((x + m - 1) // m) * m


def prepare_lsnn_weights(input_weights, recurrent_weights, matmul_dtype=jnp.bfloat16):
    """One-time weight preparation (hoisted out of the time loop).

    input_weights: (H, In), recurrent_weights: (H, H) -- PyTorch nn.Linear layout.
    Returns a single fused, padded, transposed (In_pad + H_pad, H_pad) matrix so the
    per-step current update is ONE MXU matmul: [x | z_prev] @ W_fused.
    """
    H, In = input_weights.shape
    in_pad = _round_up(In, 128)
    h_pad = _round_up(H, 128)
    w = jnp.zeros((in_pad + h_pad, h_pad), jnp.float32)
    w = w.at[:In, :H].set(jnp.asarray(input_weights, jnp.float32).T)
    w = w.at[in_pad:in_pad + H, :H].set(jnp.asarray(recurrent_weights, jnp.float32).T)
    return w.astype(matmul_dtype), (In, H, in_pad, h_pad)


def lsnn_sequence_forward(xs, state, w_fused, dims):
    """Run T fused LSNN Euler steps in a single pallas_call.

    xs: (T, B, In); state = (z, v, i, b), each (B, H); (w_fused, dims) from
    prepare_lsnn_weights.  Returns (z_seq (T, B, H), final (z, v, i, b) state).
    """
    In, H, in_pad, h_pad = dims
    T, B, in_x = xs.shape
    assert in_x == In
    b_pad = _round_up(max(B, 1), 8)
    k_pad = in_pad + h_pad
    matmul_dtype = w_fused.dtype

    # Pad once per sequence.  Zero padding is inert: padded weight rows/cols are zero,
    # padded batch rows / hidden lanes are sliced off at the end.
    xs_p = jnp.zeros((T, b_pad, in_pad), jnp.float32).at[:, :B, :In].set(
        jnp.asarray(xs, jnp.float32))

    def _pad_state(s):
        return jnp.zeros((b_pad, h_pad), jnp.float32).at[:B, :H].set(
            jnp.asarray(s, jnp.float32))

    z0, v0, i0, b0 = (_pad_state(s) for s in state)

    def kernel(x_ref, z0_ref, v0_ref, i0_ref, b0_ref, w_ref,
               zs_ref, zf_ref, vf_ref, if_ref, bf_ref,
               z_s, v_s, i_s, b_s, xz_s):
        t = pl.program_id(0)

        # Load the initial state into the VMEM-resident carry on the first step.
        @pl.when(t == 0)
        def _init():
            z_s[...] = z0_ref[...]
            v_s[...] = v0_ref[...]
            i_s[...] = i0_ref[...]
            b_s[...] = b0_ref[...]

        z = z_s[...]
        v = v_s[...]
        i = i_s[...]
        b = b_s[...]

        # Elementwise state dynamics -- kept in f32 (v5e-safe; VPU work).
        v_decayed = v + DT * TAU_MEM_INV * ((V_LEAK - v) + i)
        i_decayed = i + (-DT * TAU_SYN_INV) * i
        b_decayed = b + DT * TAU_ADAPT_INV * (V_TH - b)

        z_new = (v_decayed - b_decayed > 0.0).astype(jnp.float32)
        v_new = (1.0 - z_new) * v_decayed + z_new * V_RESET
        b_new = b_decayed + z_new * BETA

        # Fused current update: [x | z_prev] @ [W_in^T ; W_rec^T] -- one MXU pass,
        # bf16 operands, f32 accumulation.
        xz_s[:, :in_pad] = x_ref[0]
        xz_s[:, in_pad:] = z
        i_new = i_decayed + jnp.dot(xz_s[...].astype(matmul_dtype), w_ref[...],
                                    preferred_element_type=jnp.float32)

        # Carry the state in VMEM across grid steps.
        z_s[...] = z_new
        v_s[...] = v_new
        i_s[...] = i_new
        b_s[...] = b_new

        # Per-step spike output (lane-dense (B_pad, H_pad) block).
        zs_ref[0] = z_new

        # Final-state writeback only on the last step.
        @pl.when(t == pl.num_programs(0) - 1)
        def _finalize():
            zf_ref[...] = z_new
            vf_ref[...] = v_new
            if_ref[...] = i_new
            bf_ref[...] = b_new

    def state_block():
        return pl.BlockSpec((b_pad, h_pad), lambda t: (0, 0))

    out_shapes = (
        jax.ShapeDtypeStruct((T, b_pad, h_pad), jnp.float32),  # z over time
        jax.ShapeDtypeStruct((b_pad, h_pad), jnp.float32),     # z final
        jax.ShapeDtypeStruct((b_pad, h_pad), jnp.float32),     # v final
        jax.ShapeDtypeStruct((b_pad, h_pad), jnp.float32),     # i final
        jax.ShapeDtypeStruct((b_pad, h_pad), jnp.float32),     # b final
    )

    zs, zf, vf, i_f, bf = pl.pallas_call(
        kernel,
        out_shape=out_shapes,
        grid_spec=pltpu.PrefetchScalarGridSpec(
            num_scalar_prefetch=0,
            grid=(T,),
            in_specs=[
                pl.BlockSpec((1, b_pad, in_pad), lambda t: (t, 0, 0)),       # x_t
                state_block(), state_block(), state_block(), state_block(),  # z0,v0,i0,b0
                # Constant index_map: fused weight is DMA'd once and stays VMEM-resident.
                pl.BlockSpec((k_pad, h_pad), lambda t: (0, 0)),
            ],
            out_specs=(
                pl.BlockSpec((1, b_pad, h_pad), lambda t: (t, 0, 0)),         # z sequence
                state_block(), state_block(), state_block(), state_block(),  # final state
            ),
            scratch_shapes=[
                pltpu.VMEM((b_pad, h_pad), jnp.float32),   # z carry
                pltpu.VMEM((b_pad, h_pad), jnp.float32),   # v carry
                pltpu.VMEM((b_pad, h_pad), jnp.float32),   # i carry
                pltpu.VMEM((b_pad, h_pad), jnp.float32),   # b carry
                pltpu.VMEM((b_pad, k_pad), jnp.float32),   # [x | z] staging
            ],
        ),
        # The time axis is a true recurrence -> "arbitrary".
        # TODO(synk): for large H, additionally tile the hidden dim with a "parallel"
        # grid axis (v7x 2-TC sharding, VMEM budget) and single-buffer the weight spec.
        compiler_params=pltpu.CompilerParams(
            dimension_semantics=("arbitrary",),
        ),
    )(xs_p, z0, v0, i0, b0, w_fused)

    zs = zs[:, :B, :H]
    new_state = (zf[:B, :H], vf[:B, :H], i_f[:B, :H], bf[:B, :H])
    return zs, new_state


def lsnn_cell_forward(x, state, input_weights, recurrent_weights):
    """Single Euler step (LSNNCell.forward). x: (B, In); state = (z, v, i, b)."""
    w_fused, dims = prepare_lsnn_weights(input_weights, recurrent_weights)
    zs, new_state = lsnn_sequence_forward(x[None], state, w_fused, dims)
    return zs[0], new_state


# ----------------------------- pure-JAX reference ------------------------------------
def lsnn_ref_step(x, state, input_weights, recurrent_weights, matmul_dtype=jnp.bfloat16):
    """Mirrors norse lsnn_step; matmul operands cast like the kernel (bf16, f32 accum)."""
    z, v, i, b = state
    v_decayed = v + DT * TAU_MEM_INV * ((V_LEAK - v) + i)
    i_decayed = i + (-DT * TAU_SYN_INV) * i
    b_decayed = b + DT * TAU_ADAPT_INV * (V_TH - b)
    z_new = (v_decayed - b_decayed > 0.0).astype(jnp.float32)
    v_new = (1.0 - z_new) * v_decayed + z_new * V_RESET
    i_new = (i_decayed
             + jnp.dot(x.astype(matmul_dtype), input_weights.T.astype(matmul_dtype),
                       preferred_element_type=jnp.float32)
             + jnp.dot(z.astype(matmul_dtype), recurrent_weights.T.astype(matmul_dtype),
                       preferred_element_type=jnp.float32))
    b_new = b_decayed + z_new * BETA
    return z_new, (z_new, v_new, i_new, b_new)


def lsnn_ref_sequence(xs, state, input_weights, recurrent_weights):
    zs = []
    for t in range(xs.shape[0]):
        z_t, state = lsnn_ref_step(xs[t], state, input_weights, recurrent_weights)
        zs.append(z_t)
    return jnp.stack(zs), state


if __name__ == "__main__":
    batch, input_size, hidden_size, seq_len = 2, 16, 32, 8
    key = jax.random.PRNGKey(0)
    k_w_in, k_w_rec, k_xs, k_x1, k_i = jax.random.split(key, 5)

    # Deterministic parameter init matching LSNNCell.__init__
    input_weights = (jax.random.normal(k_w_in, (hidden_size, input_size), jnp.float32)
                     / jnp.sqrt(jnp.float32(input_size)))
    recurrent_weights = jax.random.normal(k_w_rec, (hidden_size, hidden_size), jnp.float32)

    # ---- single-step check (LSNNCell.forward) with a non-trivial state -------------
    x1 = jax.random.normal(k_x1, (batch, input_size), jnp.float32)
    z0 = jnp.zeros((batch, hidden_size), jnp.float32)
    v0 = jnp.full((batch, hidden_size), V_LEAK, jnp.float32)
    i0 = jax.random.normal(k_i, (batch, hidden_size), jnp.float32) * 20.0
    b0 = jnp.zeros((batch, hidden_size), jnp.float32)
    state0 = (z0, v0, i0, b0)

    z_out, (z_s, v_s, i_s, b_s) = lsnn_cell_forward(x1, state0, input_weights,
                                                    recurrent_weights)
    jax.block_until_ready((z_out, z_s, v_s, i_s, b_s))

    z_ref, (zr, vr, ir, br) = lsnn_ref_step(x1, state0, input_weights, recurrent_weights)
    assert jnp.allclose(z_out, z_ref, atol=1e-5)
    assert jnp.allclose(v_s, vr, atol=1e-5)
    assert jnp.allclose(i_s, ir, atol=1e-3, rtol=1e-3)
    assert jnp.allclose(b_s, br, atol=1e-5)

    # ---- fused T-step sequence check (weights + state stay VMEM-resident) ----------
    xs = jax.random.normal(k_xs, (seq_len, batch, input_size), jnp.float32)
    # Default state (state=None branch of forward): z=0, v=v_leak, i=0, b=0.
    state_init = (z0, v0, jnp.zeros((batch, hidden_size), jnp.float32), b0)

    w_fused, dims = prepare_lsnn_weights(input_weights, recurrent_weights)  # once
    z_seq, (z_f, v_f, i_f, b_f) = lsnn_sequence_forward(xs, state_init, w_fused, dims)
    jax.block_until_ready((z_seq, z_f, v_f, i_f, b_f))

    z_seq_ref, (zfr, vfr, ifr, bfr) = lsnn_ref_sequence(xs, state_init, input_weights,
                                                        recurrent_weights)
    assert jnp.allclose(z_seq, z_seq_ref, atol=1e-5)
    assert jnp.allclose(z_f, zfr, atol=1e-5)
    assert jnp.allclose(v_f, vfr, atol=1e-4)
    assert jnp.allclose(i_f, ifr, atol=1e-3, rtol=1e-3)
    assert jnp.allclose(b_f, bfr, atol=1e-4)

    print("KERNEL_OK")
</pallas_src>

<mosaic_0001>
module attributes {stable_mosaic.version = 11 : i64} {
  func.func @kernel(%arg0: i32, %arg1: memref<1x8x128xf32, #tpu.memory_space<vmem>>, %arg2: memref<8x128xf32, #tpu.memory_space<vmem>>, %arg3: memref<8x128xf32, #tpu.memory_space<vmem>>, %arg4: memref<8x128xf32, #tpu.memory_space<vmem>>, %arg5: memref<8x128xf32, #tpu.memory_space<vmem>>, %arg6: memref<256x128xbf16, #tpu.memory_space<vmem>>, %arg7: memref<1x8x128xf32, #tpu.memory_space<vmem>>, %arg8: memref<8x128xf32, #tpu.memory_space<vmem>>, %arg9: memref<8x128xf32, #tpu.memory_space<vmem>>, %arg10: memref<8x128xf32, #tpu.memory_space<vmem>>, %arg11: memref<8x128xf32, #tpu.memory_space<vmem>>, %arg12: memref<8x128xf32, #tpu.memory_space<vmem>>, %arg13: memref<8x128xf32, #tpu.memory_space<vmem>>, %arg14: memref<8x128xf32, #tpu.memory_space<vmem>>, %arg15: memref<8x128xf32, #tpu.memory_space<vmem>>, %arg16: memref<8x256xf32, #tpu.memory_space<vmem>>) attributes {dimension_semantics = [#tpu.dimension_semantics<arbitrary>], iteration_bounds = array<i64: 1>, scalar_prefetch = 0 : i64, scratch_operands = 5 : i64, tpu.core_type = #tpu.core_type<tc>, window_params = [{transform_indices = @transform_0, window_bounds = array<i64: 1, 8, 128>}, {pipeline_mode = #tpu.pipeline_mode<synchronous>, transform_indices = @transform_1, window_bounds = array<i64: 8, 128>}, {pipeline_mode = #tpu.pipeline_mode<synchronous>, transform_indices = @transform_2, window_bounds = array<i64: 8, 128>}, {pipeline_mode = #tpu.pipeline_mode<synchronous>, transform_indices = @transform_3, window_bounds = array<i64: 8, 128>}, {pipeline_mode = #tpu.pipeline_mode<synchronous>, transform_indices = @transform_4, window_bounds = array<i64: 8, 128>}, {pipeline_mode = #tpu.pipeline_mode<synchronous>, transform_indices = @transform_5, window_bounds = array<i64: 256, 128>}, {transform_indices = @transform_6, window_bounds = array<i64: 1, 8, 128>}, {pipeline_mode = #tpu.pipeline_mode<synchronous>, transform_indices = @transform_7, window_bounds = array<i64: 8, 128>}, {pipeline_mode = #tpu.pipeline_mode<synchronous>, transform_indices = @transform_8, window_bounds = array<i64: 8, 128>}, {pipeline_mode = #tpu.pipeline_mode<synchronous>, transform_indices = @transform_9, window_bounds = array<i64: 8, 128>}, {pipeline_mode = #tpu.pipeline_mode<synchronous>, transform_indices = @transform_10, window_bounds = array<i64: 8, 128>}]} {
    %c0_i32 = arith.constant 0 : i32
    %0 = arith.cmpi eq, %arg0, %c0_i32 : i32
    %1 = arith.extui %0 : i1 to i32
    %c0_i32_0 = arith.constant 0 : i32
    %2 = arith.cmpi ne, %1, %c0_i32_0 : i32
    scf.if %2 {
      %c0_40 = arith.constant 0 : index
      %c0_41 = arith.constant 0 : index
      %54 = vector.load %arg2[%c0_40, %c0_41] : memref<8x128xf32, #tpu.memory_space<vmem>>, vector<8x128xf32>
      %c0_42 = arith.constant 0 : index
      %c0_43 = arith.constant 0 : index
      %55 = vector.load %arg12[%c0_42, %c0_43] : memref<8x128xf32, #tpu.memory_space<vmem>>, vector<8x128xf32>
      tpu.vector_store %arg12[%c0_42, %c0_43], %54 {strides = array<i32>} : memref<8x128xf32, #tpu.memory_space<vmem>>, vector<8x128xf32>,
      %c0_44 = arith.constant 0 : index
      %c0_45 = arith.constant 0 : index
      %56 = vector.load %arg3[%c0_44, %c0_45] : memref<8x128xf32, #tpu.memory_space<vmem>>, vector<8x128xf32>
      %c0_46 = arith.constant 0 : index
      %c0_47 = arith.constant 0 : index
      %57 = vector.load %arg13[%c0_46, %c0_47] : memref<8x128xf32, #tpu.memory_space<vmem>>, vector<8x128xf32>
      tpu.vector_store %arg13[%c0_46, %c0_47], %56 {strides = array<i32>} : memref<8x128xf32, #tpu.memory_space<vmem>>, vector<8x128xf32>,
      %c0_48 = arith.constant 0 : index
      %c0_49 = arith.constant 0 : index
      %58 = vector.load %arg4[%c0_48, %c0_49] : memref<8x128xf32, #tpu.memory_space<vmem>>, vector<8x128xf32>
      %c0_50 = arith.constant 0 : index
      %c0_51 = arith.constant 0 : index
      %59 = vector.load %arg14[%c0_50, %c0_51] : memref<8x128xf32, #tpu.memory_space<vmem>>, vector<8x128xf32>
      tpu.vector_store %arg14[%c0_50, %c0_51], %58 {strides = array<i32>} : memref<8x128xf32, #tpu.memory_space<vmem>>, vector<8x128xf32>,
      %c0_52 = arith.constant 0 : index
      %c0_53 = arith.constant 0 : index
      %60 = vector.load %arg5[%c0_52, %c0_53] : memref<8x128xf32, #tpu.memory_space<vmem>>, vector<8x128xf32>
      %c0_54 = arith.constant 0 : index
      %c0_55 = arith.constant 0 : index
      %61 = vector.load %arg15[%c0_54, %c0_55] : memref<8x128xf32, #tpu.memory_space<vmem>>, vector<8x128xf32>
      tpu.vector_store %arg15[%c0_54, %c0_55], %60 {strides = array<i32>} : memref<8x128xf32, #tpu.memory_space<vmem>>, vector<8x128xf32>,
    } else {
    }
    %c0 = arith.constant 0 : index
    %c0_1 = arith.constant 0 : index
    %3 = vector.load %arg12[%c0, %c0_1] : memref<8x128xf32, #tpu.memory_space<vmem>>, vector<8x128xf32>
    %c0_2 = arith.constant 0 : index
    %c0_3 = arith.constant 0 : index
    %4 = vector.load %arg13[%c0_2, %c0_3] : memref<8x128xf32, #tpu.memory_space<vmem>>, vector<8x128xf32>
    %c0_4 = arith.constant 0 : index
    %c0_5 = arith.constant 0 : index
    %5 = vector.load %arg14[%c0_4, %c0_5] : memref<8x128xf32, #tpu.memory_space<vmem>>, vector<8x128xf32>
    %c0_6 = arith.constant 0 : index
    %c0_7 = arith.constant 0 : index
    %6 = vector.load %arg15[%c0_6, %c0_7] : memref<8x128xf32, #tpu.memory_space<vmem>>, vector<8x128xf32>
    %cst = arith.constant 0.000000e+00 : f32
    %7 = vector.broadcast %cst : f32 to vector<8x128xf32>
    %8 = arith.subf %7, %4 : vector<8x128xf32>
    %9 = arith.addf %8, %5 : vector<8x128xf32>
    %cst_8 = arith.constant 1.000000e-01 : f32
    %10 = vector.broadcast %cst_8 : f32 to vector<8x128xf32>
    %11 = arith.mulf %10, %9 : vector<8x128xf32>
    %12 = arith.addf %4, %11 : vector<8x128xf32>
    %cst_9 = arith.constant -2.000000e-01 : f32
    %13 = vector.broadcast %cst_9 : f32 to vector<8x128xf32>
    %14 = arith.mulf %13, %5 : vector<8x128xf32>
    %15 = arith.addf %5, %14 : vector<8x128xf32>
    %cst_10 = arith.constant 1.000000e+00 : f32
    %16 = vector.broadcast %cst_10 : f32 to vector<8x128xf32>
    %17 = arith.subf %16, %6 : vector<8x128xf32>
    %cst_11 = arith.constant 1.42857141E-6 : f32
    %18 = vector.broadcast %cst_11 : f32 to vector<8x128xf32>
    %19 = arith.mulf %18, %17 : vector<8x128xf32>
    %20 = arith.addf %6, %19 : vector<8x128xf32>
    %21 = arith.subf %12, %20 : vector<8x128xf32>
    %cst_12 = arith.constant 0.000000e+00 : f32
    %22 = vector.broadcast %cst_12 : f32 to vector<8x128xf32>
    %23 = arith.cmpf ogt, %21, %22 : vector<8x128xf32>
    %24 = arith.extui %23 : vector<8x128xi1> to vector<8x128xi32>
    %25 = arith.sitofp %24 : vector<8x128xi32> to vector<8x128xf32>
    %cst_13 = arith.constant 1.000000e+00 : f32
    %26 = vector.broadcast %cst_13 : f32 to vector<8x128xf32>
    %27 = arith.subf %26, %25 : vector<8x128xf32>
    %28 = arith.mulf %27, %12 : vector<8x128xf32>
    %cst_14 = arith.constant 0.000000e+00 : f32
    %29 = vector.broadcast %cst_14 : f32 to vector<8x128xf32>
    %30 = arith.mulf %25, %29 : vector<8x128xf32>
    %31 = arith.addf %28, %30 : vector<8x128xf32>
    %cst_15 = arith.constant 1.800000e+00 : f32
    %32 = vector.broadcast %cst_15 : f32 to vector<8x128xf32>
    %33 = arith.mulf %25, %32 : vector<8x128xf32>
    %34 = arith.addf %20, %33 : vector<8x128xf32>
    %c0_16 = arith.constant 0 : index
    %c0_17 = arith.constant 0 : index
    %c0_18 = arith.constant 0 : index
    %35 = vector.load %arg1[%c0_16, %c0_17, %c0_18] : memref<1x8x128xf32, #tpu.memory_space<vmem>>, vector<1x8x128xf32>
    %36 = vector.shape_cast %35 : vector<1x8x128xf32> to vector<8x128xf32>
    %c0_19 = arith.constant 0 : index
    %c0_20 = arith.constant 0 : index
    %37 = vector.load %arg16[%c0_19, %c0_20] : memref<8x256xf32, #tpu.memory_space<vmem>>, vector<8x128xf32>
    tpu.vector_store %arg16[%c0_19, %c0_20], %36 {strides = array<i32>} : memref<8x256xf32, #tpu.memory_space<vmem>>, vector<8x128xf32>,
    %c0_21 = arith.constant 0 : index
    %c128 = arith.constant 128 : index
    %38 = vector.load %arg16[%c0_21, %c128] : memref<8x256xf32, #tpu.memory_space<vmem>>, vector<8x128xf32>
    tpu.vector_store %arg16[%c0_21, %c128], %3 {strides = array<i32>} : memref<8x256xf32, #tpu.memory_space<vmem>>, vector<8x128xf32>,
    %c0_22 = arith.constant 0 : index
    %c0_23 = arith.constant 0 : index
    %39 = vector.load %arg16[%c0_22, %c0_23] : memref<8x256xf32, #tpu.memory_space<vmem>>, vector<8x256xf32>
    %40 = arith.truncf %39 : vector<8x256xf32> to vector<8x256xbf16>
    %c0_24 = arith.constant 0 : index
    %c0_25 = arith.constant 0 : index
    %41 = vector.load %arg6[%c0_24, %c0_25] : memref<256x128xbf16, #tpu.memory_space<vmem>>, vector<256x128xbf16>
    %cst_26 = arith.constant dense<0.000000e+00> : vector<8x128xf32>
    %42 = tpu.matmul %40, %41, %cst_26 {dimension_numbers = #tpu.dot_dimension_numbers<[1], [0], [0], [1], [0, 0, 1, 1], [], []>} : vector<8x256xbf16>, vector<256x128xbf16>, vector<8x128xf32> -> vector<8x128xf32>
    %43 = arith.addf %15, %42 : vector<8x128xf32>
    %c0_27 = arith.constant 0 : index
    %c0_28 = arith.constant 0 : index
    %44 = vector.load %arg12[%c0_27, %c0_28] : memref<8x128xf32, #tpu.memory_space<vmem>>, vector<8x128xf32>
    tpu.vector_store %arg12[%c0_27, %c0_28], %25 {strides = array<i32>} : memref<8x128xf32, #tpu.memory_space<vmem>>, vector<8x128xf32>,
    %c0_29 = arith.constant 0 : index
    %c0_30 = arith.constant 0 : index
    %45 = vector.load %arg13[%c0_29, %c0_30] : memref<8x128xf32, #tpu.memory_space<vmem>>, vector<8x128xf32>
    tpu.vector_store %arg13[%c0_29, %c0_30], %31 {strides = array<i32>} : memref<8x128xf32, #tpu.memory_space<vmem>>, vector<8x128xf32>,
    %c0_31 = arith.constant 0 : index
    %c0_32 = arith.constant 0 : index
    %46 = vector.load %arg14[%c0_31, %c0_32] : memref<8x128xf32, #tpu.memory_space<vmem>>, vector<8x128xf32>
    tpu.vector_store %arg14[%c0_31, %c0_32], %43 {strides = array<i32>} : memref<8x128xf32, #tpu.memory_space<vmem>>, vector<8x128xf32>,
    %c0_33 = arith.constant 0 : index
    %c0_34 = arith.constant 0 : index
    %47 = vector.load %arg15[%c0_33, %c0_34] : memref<8x128xf32, #tpu.memory_space<vmem>>, vector<8x128xf32>
    tpu.vector_store %arg15[%c0_33, %c0_34], %34 {strides = array<i32>} : memref<8x128xf32, #tpu.memory_space<vmem>>, vector<8x128xf32>,
    %c0_35 = arith.constant 0 : index
    %c0_36 = arith.constant 0 : index
    %c0_37 = arith.constant 0 : index
    %48 = vector.load %arg7[%c0_35, %c0_36, %c0_37] : memref<1x8x128xf32, #tpu.memory_space<vmem>>, vector<1x8x128xf32>
    %49 = vector.shape_cast %48 : vector<1x8x128xf32> to vector<8x128xf32>
    %50 = vector.shape_cast %25 : vector<8x128xf32> to vector<1x8x128xf32>
    tpu.vector_store %arg7[%c0_35, %c0_36, %c0_37], %50 {strides = array<i32>} : memref<1x8x128xf32, #tpu.memory_space<vmem>>, vector<1x8x128xf32>,
    %c0_i32_38 = arith.constant 0 : i32
    %51 = arith.cmpi eq, %arg0, %c0_i32_38 : i32
    %52 = arith.extui %51 : i1 to i32
    %c0_i32_39 = arith.constant 0 : i32
    %53 = arith.cmpi ne, %52, %c0_i32_39 : i32
    scf.if %53 {
      %c0_40 = arith.constant 0 : index
      %c0_41 = arith.constant 0 : index
      %54 = vector.load %arg8[%c0_40, %c0_41] : memref<8x128xf32, #tpu.memory_space<vmem>>, vector<8x128xf32>
      tpu.vector_store %arg8[%c0_40, %c0_41], %25 {strides = array<i32>} : memref<8x128xf32, #tpu.memory_space<vmem>>, vector<8x128xf32>,
      %c0_42 = arith.constant 0 : index
      %c0_43 = arith.constant 0 : index
      %55 = vector.load %arg9[%c0_42, %c0_43] : memref<8x128xf32, #tpu.memory_space<vmem>>, vector<8x128xf32>
      tpu.vector_store %arg9[%c0_42, %c0_43], %31 {strides = array<i32>} : memref<8x128xf32, #tpu.memory_space<vmem>>, vector<8x128xf32>,
      %c0_44 = arith.constant 0 : index
      %c0_45 = arith.constant 0 : index
      %56 = vector.load %arg10[%c0_44, %c0_45] : memref<8x128xf32, #tpu.memory_space<vmem>>, vector<8x128xf32>
      tpu.vector_store %arg10[%c0_44, %c0_45], %43 {strides = array<i32>} : memref<8x128xf32, #tpu.memory_space<vmem>>, vector<8x128xf32>,
      %c0_46 = arith.constant 0 : index
      %c0_47 = arith.constant 0 : index
      %57 = vector.load %arg11[%c0_46, %c0_47] : memref<8x128xf32, #tpu.memory_space<vmem>>, vector<8x128xf32>
      tpu.vector_store %arg11[%c0_46, %c0_47], %34 {strides = array<i32>} : memref<8x128xf32, #tpu.memory_space<vmem>>, vector<8x128xf32>,
    } else {
    }
    return
  }
  func.func @transform_0(%arg0: i32) -> (i32, i32, i32) {
    %c0_i32 = arith.constant 0 : i32
    %c0_i32_0 = arith.constant 0 : i32
    %c0_i32_1 = arith.constant 0 : i32
    return %arg0, %c0_i32, %c0_i32_0 : i32, i32, i32
  }
  func.func @transform_1(%arg0: i32) -> (i32, i32) {
    %c0_i32 = arith.constant 0 : i32
    %c0_i32_0 = arith.constant 0 : i32
    %c0_i32_1 = arith.constant 0 : i32
    return %c0_i32, %c0_i32_0 : i32, i32
  }
  func.func @transform_2(%arg0: i32) -> (i32, i32) {
    %c0_i32 = arith.constant 0 : i32
    %c0_i32_0 = arith.constant 0 : i32
    %c0_i32_1 = arith.constant 0 : i32
    return %c0_i32, %c0_i32_0 : i32, i32
  }
  func.func @transform_3(%arg0: i32) -> (i32, i32) {
    %c0_i32 = arith.constant 0 : i32
    %c0_i32_0 = arith.constant 0 : i32
    %c0_i32_1 = arith.constant 0 : i32
    return %c0_i32, %c0_i32_0 : i32, i32
  }
  func.func @transform_4(%arg0: i32) -> (i32, i32) {
    %c0_i32 = arith.constant 0 : i32
    %c0_i32_0 = arith.constant 0 : i32
    %c0_i32_1 = arith.constant 0 : i32
    return %c0_i32, %c0_i32_0 : i32, i32
  }
  func.func @transform_5(%arg0: i32) -> (i32, i32) {
    %c0_i32 = arith.constant 0 : i32
    %c0_i32_0 = arith.constant 0 : i32
    %c0_i32_1 = arith.constant 0 : i32
    return %c0_i32, %c0_i32_0 : i32, i32
  }
  func.func @transform_6(%arg0: i32) -> (i32, i32, i32) {
    %c0_i32 = arith.constant 0 : i32
    %c0_i32_0 = arith.constant 0 : i32
    %c0_i32_1 = arith.constant 0 : i32
    return %arg0, %c0_i32, %c0_i32_0 : i32, i32, i32
  }
  func.func @transform_7(%arg0: i32) -> (i32, i32) {
    %c0_i32 = arith.constant 0 : i32
    %c0_i32_0 = arith.constant 0 : i32
    %c0_i32_1 = arith.constant 0 : i32
    return %c0_i32, %c0_i32_0 : i32, i32
  }
  func.func @transform_8(%arg0: i32) -> (i32, i32) {
    %c0_i32 = arith.constant 0 : i32
    %c0_i32_0 = arith.constant 0 : i32
    %c0_i32_1 = arith.constant 0 : i32
    return %c0_i32, %c0_i32_0 : i32, i32
  }
  func.func @transform_9(%arg0: i32) -> (i32, i32) {
    %c0_i32 = arith.constant 0 : i32
    %c0_i32_0 = arith.constant 0 : i32
    %c0_i32_1 = arith.constant 0 : i32
    return %c0_i32, %c0_i32_0 : i32, i32
  }
  func.func @transform_10(%arg0: i32) -> (i32, i32) {
    %c0_i32 = arith.constant 0 : i32
    %c0_i32_0 = arith.constant 0 : i32
    %c0_i32_1 = arith.constant 0 : i32
    return %c0_i32, %c0_i32_0 : i32, i32
  }
}

</mosaic_0001>

<llo_original>
// kernel: tpu_custom_call.1
$region0: #{tpu_custom_call.1}
  #allocation0 [shape = 'u32[]', space=smem, size = 0x4, offset = 0x4, fixed_abs, tag = 'smem constant byte address 0x4 - core index']
  #allocation1 [shape = 'u32[72,128]{1,0:T(1,128)}', space=vmem, size = 0x9000, scoped, tag = 'internal scratch']
  #allocation2 [shape = 'f32[8,128]{1,0:T(8,128)}', space=vmem, size = 0x1000, scoped, tag = 'scratch operand']
  #allocation3 [shape = 'f32[8,128]{1,0:T(8,128)}', space=vmem, size = 0x1000, scoped, tag = 'scratch operand']
  #allocation4 [shape = 'f32[8,128]{1,0:T(8,128)}', space=vmem, size = 0x1000, scoped, tag = 'scratch operand']
  #allocation5 [shape = 'f32[8,128]{1,0:T(8,128)}', space=vmem, size = 0x1000, scoped, tag = 'scratch operand']
  #allocation6 [shape = 'f32[8,256]{1,0:T(8,128)}', space=vmem, size = 0x2000, scoped, tag = 'scratch operand']
  %s0 = inlined_call_operand.hbm [shape: f32[1,8,128], index: 0, kind: input, shape index: {}]
  %s1 = inlined_call_operand.hbm [shape: f32[8,128], index: 1, kind: input, shape index: {}]
  %s2 = inlined_call_operand.hbm [shape: f32[8,128], index: 2, kind: input, shape index: {}]
  %s3 = inlined_call_operand.hbm [shape: f32[8,128], index: 3, kind: input, shape index: {}]
  %s4 = inlined_call_operand.hbm [shape: f32[8,128], index: 4, kind: input, shape index: {}]
  %s5 = inlined_call_operand.hbm [shape: bf16[256,128], index: 5, kind: input, shape index: {}]
  %s6 = inlined_call_operand.hbm [shape: f32[1,8,128], index: 6, kind: output, shape index: {0}]
  %s7 = inlined_call_operand.hbm [shape: f32[8,128], index: 7, kind: output, shape index: {1}]
  %s8 = inlined_call_operand.hbm [shape: f32[8,128], index: 8, kind: output, shape index: {2}]
  %s9 = inlined_call_operand.hbm [shape: f32[8,128], index: 9, kind: output, shape index: {3}]
  %s10 = inlined_call_operand.hbm [shape: f32[8,128], index: 10, kind: output, shape index: {4}]
  %11 = xla_tuple %s6, %s7, %s8, %s9, %s10
  %s12 = sld [smem:[#allocation0]]
  $region98: #{tpu_custom_call.1} parent=0
    _
  %s14 = ssub.s32 1, %s12
  %s15 = scalar_select 0, %s14, %s12
  $region1: #{tpu_custom_call.1} parent=0
    #allocation7 [shape = 'u8[4096]{0}', space=vmem, size = 0x1000, scoped, tag = 'input window, operand 0, single buffered']
    #allocation8 [shape = 's32[1]{0}', space=sflag, size = 0x4, scoped, tag = 'scoped memory for tpu_custom_call.1']
    #allocation9 [shape = 's32[1]{0}', space=sflag, size = 0x4, scoped, tag = 'scoped memory for tpu_custom_call.1']
    #allocation10 [shape = 'u8[4096]{0}', space=vmem, size = 0x1000, scoped, tag = 'input window, operand 1, single buffered']
    #allocation11 [shape = 's32[1]{0}', space=sflag, size = 0x4, scoped, tag = 'scoped memory for tpu_custom_call.1']
    #allocation12 [shape = 'u8[4096]{0}', space=vmem, size = 0x1000, scoped, tag = 'input window, operand 2, single buffered']
    #allocation13 [shape = 'u8[4096]{0}', space=vmem, size = 0x1000, scoped, tag = 'input window, operand 3, single buffered']
    #allocation14 [shape = 's32[1]{0}', space=sflag, size = 0x4, scoped, tag = 'scoped memory for tpu_custom_call.1']
    #allocation15 [shape = 'u8[4096]{0}', space=vmem, size = 0x1000, scoped, tag = 'input window, operand 4, single buffered']
    #allocation16 [shape = 'u8[65536]{0}', space=vmem, size = 0x10000, scoped, tag = 'input window, operand 5, single buffered']
    #allocation17 [shape = 's32[1]{0}', space=sflag, size = 0x4, scoped, tag = 'scoped memory for tpu_custom_call.1']
    #allocation18 [shape = 'u8[4096]{0}', space=vmem, size = 0x1000, scoped, tag = 'output window, operand 0, single buffered']
    #allocation19 [shape = 'u8[4096]{0}', space=vmem, size = 0x1000, scoped, tag = 'output window, operand 1, single buffered']
    #allocation20 [shape = 's32[1]{0}', space=sflag, size = 0x4, scoped, tag = 'scoped memory for tpu_custom_call.1']
    #allocation21 [shape = 'u8[4096]{0}', space=vmem, size = 0x1000, scoped, tag = 'output window, operand 2, single buffered']
    #allocation22 [shape = 'u8[4096]{0}', space=vmem, size = 0x1000, scoped, tag = 'output window, operand 3, single buffered']
    #allocation23 [shape = 's32[1]{0}', space=sflag, size = 0x4, scoped, tag = 'scoped memory for tpu_custom_call.1']
    #allocation24 [shape = 'u8[4096]{0}', space=vmem, size = 0x1000, scoped, tag = 'output window, operand 4, single buffered']
    %16 = vsyncpa [#allocation8], 0
    %17 = vsyncpa [#allocation11], 0
    %18 = vsyncpa [#allocation14], 0
    %19 = vsyncpa [#allocation17], 0
    %20 = vsyncpa [#allocation9], 0
    %21 = vsyncpa [#allocation20], 0
    %22 = vsyncpa [#allocation23], 0
    // Predicated region
    $region2: #{tpu_custom_call.1} parent=1 // pred_check
      _
    $region3: #{tpu_custom_call.1} parent=1 // pred_check_branch
      %24 = sbr.rel (0) target = $region5
    $region4: #{tpu_custom_call.1} parent=1 // pred_region
      %26 = vsyncadd [#allocation8], 0
      %s28 = sshll.u32 %s0, 4
      %s29 = int_to_ptr.hbm [resolvable:$true] %s28
      %s30 = sshll.u32 [#allocation7], 4
      %s31 = int_to_ptr.vmem [resolvable:$true] %s30
      %33 = dma.hbm_to_vmem [thread:$0]  %s29, 128, %s31, [#allocation8]
    $region5: #{tpu_custom_call.1} parent=1 // pred_fallthru
      _
    // Predicated region
    $region6: #{tpu_custom_call.1} parent=1 // pred_check
      _
    $region7: #{tpu_custom_call.1} parent=1 // pred_check_branch
      %35 = sbr.rel (0) target = $region9
    $region8: #{tpu_custom_call.1} parent=1 // pred_region
      %37 = vsyncadd [#allocation11], 0
      %s39 = sshll.u32 %s1, 4
      %s40 = int_to_ptr.hbm [resolvable:$true] %s39
      %s41 = sshll.u32 [#allocation10], 4
      %s42 = int_to_ptr.vmem [resolvable:$true] %s41
      %44 = dma.hbm_to_vmem [thread:$0]  %s40, 128, %s42, [#allocation11]
    $region9: #{tpu_custom_call.1} parent=1 // pred_fallthru
      _
    // Predicated region
    $region10: #{tpu_custom_call.1} parent=1 // pred_check
      _
    $region11: #{tpu_custom_call.1} parent=1 // pred_check_branch
      %46 = sbr.rel (0) target = $region13
    $region12: #{tpu_custom_call.1} parent=1 // pred_region
      %48 = vsyncadd [#allocation11], 0
      %s50 = sshll.u32 %s2, 4
      %s51 = int_to_ptr.hbm [resolvable:$true] %s50
      %s52 = sshll.u32 [#allocation12], 4
      %s53 = int_to_ptr.vmem [resolvable:$true] %s52
      %55 = dma.hbm_to_vmem [thread:$0]  %s51, 128, %s53, [#allocation11]
    $region13: #{tpu_custom_call.1} parent=1 // pred_fallthru
      _
    // Predicated region
    $region14: #{tpu_custom_call.1} parent=1 // pred_check
      _
    $region15: #{tpu_custom_call.1} parent=1 // pred_check_branch
      %57 = sbr.rel (0) target = $region17
    $region16: #{tpu_custom_call.1} parent=1 // pred_region
      %59 = vsyncadd [#allocation14], 0
      %s61 = sshll.u32 %s3, 4
      %s62 = int_to_ptr.hbm [resolvable:$true] %s61
      %s63 = sshll.u32 [#allocation13], 4
      %s64 = int_to_ptr.vmem [resolvable:$true] %s63
      %66 = dma.hbm_to_vmem [thread:$0]  %s62, 128, %s64, [#allocation14]
    $region17: #{tpu_custom_call.1} parent=1 // pred_fallthru
      _
    // Predicated region
    $region18: #{tpu_custom_call.1} parent=1 // pred_check
      _
    $region19: #{tpu_custom_call.1} parent=1 // pred_check_branch
      %68 = sbr.rel (0) target = $region21
    $region20: #{tpu_custom_call.1} parent=1 // pred_region
      %70 = vsyncadd [#allocation14], 0
      %s72 = sshll.u32 %s4, 4
      %s73 = int_to_ptr.hbm [resolvable:$true] %s72
      %s74 = sshll.u32 [#allocation15], 4
      %s75 = int_to_ptr.vmem [resolvable:$true] %s74
      %77 = dma.hbm_to_vmem [thread:$0]  %s73, 128, %s75, [#allocation14]
    $region21: #{tpu_custom_call.1} parent=1 // pred_fallthru
      _
    // Predicated region
    $region22: #{tpu_custom_call.1} parent=1 // pred_check
      _
    $region23: #{tpu_custom_call.1} parent=1 // pred_check_branch
      %79 = sbr.rel (0) target = $region25
    $region24: #{tpu_custom_call.1} parent=1 // pred_region
      %81 = vsyncadd [#allocation17], 0
      %s82 = sshll.u32 %s5, 4
      %s83 = int_to_ptr.hbm [resolvable:$true] %s82
      %s84 = sshll.u32 [#allocation16], 4
      %s85 = int_to_ptr.vmem [resolvable:$true] %s84
      %90 = dma.hbm_to_vmem [thread:$0]  %s83, 2048, %s85, [#allocation17], 64, 64, 4
    $region25: #{tpu_custom_call.1} parent=1 // pred_fallthru
      _
    // Predicated region
    $region26: #{tpu_custom_call.1} parent=1 // pred_check
      _
    $region27: #{tpu_custom_call.1} parent=1 // pred_check_branch
      %92 = sbr.rel (0) target = $region29
    $region28: #{tpu_custom_call.1} parent=1 // pred_region
      %94 = dma.done [#allocation8], 128
    $region29: #{tpu_custom_call.1} parent=1 // pred_fallthru
      _
    // Predicated region
    $region30: #{tpu_custom_call.1} parent=1 // pred_check
      _
    $region31: #{tpu_custom_call.1} parent=1 // pred_check_branch
      %96 = sbr.rel (0) target = $region33
    $region32: #{tpu_custom_call.1} parent=1 // pred_region
      %98 = dma.done [#allocation11], 128
    $region33: #{tpu_custom_call.1} parent=1 // pred_fallthru
      _
    // Predicated region
    $region34: #{tpu_custom_call.1} parent=1 // pred_check
      _
    $region35: #{tpu_custom_call.1} parent=1 // pred_check_branch
      %100 = sbr.rel (0) target = $region37
    $region36: #{tpu_custom_call.1} parent=1 // pred_region
      %102 = dma.done [#allocation11], 128
    $region37: #{tpu_custom_call.1} parent=1 // pred_fallthru
      _
    // Predicated region
    $region38: #{tpu_custom_call.1} parent=1 // pred_check
      _
    $region39: #{tpu_custom_call.1} parent=1 // pred_check_branch
      %104 = sbr.rel (0) target = $region41
    $region40: #{tpu_custom_call.1} parent=1 // pred_region
      %106 = dma.done [#allocation14], 128
    $region41: #{tpu_custom_call.1} parent=1 // pred_fallthru
      _
    // Predicated region
    $region42: #{tpu_custom_call.1} parent=1 // pred_check
      _
    $region43: #{tpu_custom_call.1} parent=1 // pred_check_branch
      %108 = sbr.rel (0) target = $region45
    $region44: #{tpu_custom_call.1} parent=1 // pred_region
      %110 = dma.done [#allocation14], 128
    $region45: #{tpu_custom_call.1} parent=1 // pred_fallthru
      _
    // Predicated region
    $region46: #{tpu_custom_call.1} parent=1 // pred_check
      _
    $region47: #{tpu_custom_call.1} parent=1 // pred_check_branch
      %112 = sbr.rel (0) target = $region49
    $region48: #{tpu_custom_call.1} parent=1 // pred_region
      %114 = dma.done [#allocation17], 2048
    $region49: #{tpu_custom_call.1} parent=1 // pred_fallthru
      _
    %p115 = scmp.eq.s32.totalorder 0, 0
    // Predicated region
    $region50: #{tpu_custom_call.1} parent=1 // pred_check
      %p116 = pneg %p115
    $region51: #{tpu_custom_call.1} parent=1 // pred_check_branch
      %118 = sbr.rel (%p116) target = $region53
    $region52: #{tpu_custom_call.1} parent=1 // pred_region
      %v119 = vld [vmem:[#allocation10] sm:$0xff]
      %120 = vst [vmem:[#allocation2] sm:$0xff] %v119
      %v121 = vld [vmem:[#allocation12] sm:$0xff]
      %122 = vst [vmem:[#allocation3] sm:$0xff] %v121
      %v123 = vld [vmem:[#allocation13] sm:$0xff]
      %124 = vst [vmem:[#allocation4] sm:$0xff] %v123
      %v125 = vld [vmem:[#allocation15] sm:$0xff]
      %126 = vst [vmem:[#allocation5] sm:$0xff] %v125
    $region53: #{tpu_custom_call.1} parent=1 // pred_fallthru
      _
    %v127 = vld [vmem:[#allocation2] sm:$0xff]
    %v128 = vld [vmem:[#allocation3] sm:$0xff]
    %v129 = vld [vmem:[#allocation4] sm:$0xff]
    %v130 = vld [vmem:[#allocation5] sm:$0xff]
    %v131 = vsub.f32 0.0, %v128
    %v132 = vadd.f32 %v131, %v129
    %v133 = vmul.f32 %v132, 0.1
    %v134 = vadd.f32 %v128, %v133
    %v135 = vmul.f32 %v129, -0.2
    %v136 = vadd.f32 %v129, %v135
    %v137 = vsub.f32 1.0, %v130
    %v138 = vmul.f32 %v137, 1.4285714e-06
    %v139 = vadd.f32 %v130, %v138
    %v140 = vsub.f32 %v134, %v139
    %vm141 = vcmp.gt.f32.partialorder %v140, 0.0
    %v142 = vsel %vm141, 1, 0
    %v143 = vcvt.s32.f32 %v142
    %v144 = vsub.f32 1.0, %v143
    %v145 = vmul.f32 %v144, %v134
    %v146 = vmul.f32 %v143, 0.0
    %v147 = vadd.f32 %v145, %v146
    %v148 = vmul.f32 %v143, 1.8
    %v149 = vadd.f32 %v139, %v148
    %v150 = vld [vmem:[#allocation7] sm:$0xff]
    %151 = vst [vmem:[#allocation6] sm:$0xff] %v150
    %152 = vst [vmem:[#allocation6 + $0x8] sm:$0xff] %v127
    %v153 = vld [vmem:[#allocation6] sm:$0xff]
    %v154 = vld [vmem:[#allocation6 + $0x8] sm:$0xff]
    %v155 = vpack.c.bf16 %v153, %v153
    %v156 = vpack.c.bf16 %v154, %v154
    %v157 = vld [vmem:[#allocation16] sm:$0xf]
    %v158 = vld [vmem:[#allocation16 + $0x4] sm:$0xf]
    %v159 = vld [vmem:[#allocation16 + $0x8] sm:$0xf]
    %v160 = vld [vmem:[#allocation16 + $0xc] sm:$0xf]
    %v161 = vld [vmem:[#allocation16 + $0x10] sm:$0xf]
    %v162 = vld [vmem:[#allocation16 + $0x14] sm:$0xf]
    %v163 = vld [vmem:[#allocation16 + $0x18] sm:$0xf]
    %v164 = vld [vmem:[#allocation16 + $0x1c] sm:$0xf]
    %v165 = vld [vmem:[#allocation16 + $0x20] sm:$0xf]
    %v166 = vld [vmem:[#allocation16 + $0x24] sm:$0xf]
    %v167 = vld [vmem:[#allocation16 + $0x28] sm:$0xf]
    %v168 = vld [vmem:[#allocation16 + $0x2c] sm:$0xf]
    %v169 = vld [vmem:[#allocation16 + $0x30] sm:$0xf]
    %v170 = vld [vmem:[#allocation16 + $0x34] sm:$0xf]
    %v171 = vld [vmem:[#allocation16 + $0x38] sm:$0xf]
    %v172 = vld [vmem:[#allocation16 + $0x3c] sm:$0xf]
    %v173 = vld [vmem:[#allocation16 + $0x40] sm:$0xf]
    %v174 = vld [vmem:[#allocation16 + $0x44] sm:$0xf]
    %v175 = vld [vmem:[#allocation16 + $0x48] sm:$0xf]
    %v176 = vld [vmem:[#allocation16 + $0x4c] sm:$0xf]
    %v177 = vld [vmem:[#allocation16 + $0x50] sm:$0xf]
    %v178 = vld [vmem:[#allocation16 + $0x54] sm:$0xf]
    %v179 = vld [vmem:[#allocation16 + $0x58] sm:$0xf]
    %v180 = vld [vmem:[#allocation16 + $0x5c] sm:$0xf]
    %v181 = vld [vmem:[#allocation16 + $0x60] sm:$0xf]
    %v182 = vld [vmem:[#allocation16 + $0x64] sm:$0xf]
    %v183 = vld [vmem:[#allocation16 + $0x68] sm:$0xf]
    %v184 = vld [vmem:[#allocation16 + $0x6c] sm:$0xf]
    %v185 = vld [vmem:[#allocation16 + $0x70] sm:$0xf]
    %v186 = vld [vmem:[#allocation16 + $0x74] sm:$0xf]
    %v187 = vld [vmem:[#allocation16 + $0x78] sm:$0xf]
    %v188 = vld [vmem:[#allocation16 + $0x7c] sm:$0xf]
    %v221 = vunpack.c.l.b16 %v157
    %v222 = vunpack.c.l.b16 %v158
    %v223 = vunpack.c.l.b16 %v159
    %v224 = vunpack.c.l.b16 %v160
    %v225 = vunpack.c.l.b16 %v161
    %v226 = vunpack.c.l.b16 %v162
    %v227 = vunpack.c.l.b16 %v163
    %v228 = vunpack.c.l.b16 %v164
    %v229 = vunpack.c.l.b16 %v165
    %v230 = vunpack.c.l.b16 %v166
    %v231 = vunpack.c.l.b16 %v167
    %v232 = vunpack.c.l.b16 %v168
    %v233 = vunpack.c.l.b16 %v169
    %v234 = vunpack.c.l.b16 %v170
    %v235 = vunpack.c.l.b16 %v171
    %v236 = vunpack.c.l.b16 %v172
    %v237 = vunpack.c.l.b16 %v173
    %v238 = vunpack.c.l.b16 %v174
    %v239 = vunpack.c.l.b16 %v175
    %v240 = vunpack.c.l.b16 %v176
    %v241 = vunpack.c.l.b16 %v177
    %v242 = vunpack.c.l.b16 %v178
    %v243 = vunpack.c.l.b16 %v179
    %v244 = vunpack.c.l.b16 %v180
    %v245 = vunpack.c.l.b16 %v181
    %v246 = vunpack.c.l.b16 %v182
    %v247 = vunpack.c.l.b16 %v183
    %v248 = vunpack.c.l.b16 %v184
    %v249 = vunpack.c.l.b16 %v185
    %v250 = vunpack.c.l.b16 %v186
    %v251 = vunpack.c.l.b16 %v187
    %v252 = vunpack.c.l.b16 %v188
    %v253 = vpack.c.b16 %v222, %v221
    %v254 = vpack.c.b16 %v224, %v223
    %v255 = vpack.c.b16 %v226, %v225
    %v256 = vpack.c.b16 %v228, %v227
    %v257 = vpack.c.b16 %v230, %v229
    %v258 = vpack.c.b16 %v232, %v231
    %v259 = vpack.c.b16 %v234, %v233
    %v260 = vpack.c.b16 %v236, %v235
    %v261 = vpack.c.b16 %v238, %v237
    %v262 = vpack.c.b16 %v240, %v239
    %v263 = vpack.c.b16 %v242, %v241
    %v264 = vpack.c.b16 %v244, %v243
    %v265 = vpack.c.b16 %v246, %v245
    %v266 = vpack.c.b16 %v248, %v247
    %v267 = vpack.c.b16 %v250, %v249
    %v268 = vpack.c.b16 %v252, %v251
    %285 = vmatpush.bf16.msra.mxu0 %v260
    %286 = vmatpush.bf16.msra.mxu0 %v259
    %287 = vmatpush.bf16.msra.mxu0 %v258
    %288 = vmatpush.bf16.msra.mxu0 %v257
    %289 = vmatpush.bf16.msra.mxu0 %v256
    %290 = vmatpush.bf16.msra.mxu0 %v255
    %291 = vmatpush.bf16.msra.mxu0 %v254
    %292 = vmatpush.bf16.msra.mxu0 %v253
    %293 = vmatmul.bf16.gmra.mxu0 %v155
    %v294 = vpop.f32.mrf.mxu0
    %v295 = vadd.f32 0.0, %v294
    %v296 = vpop.f32.mrf.mxu0
    %297 = vdwg.mxu0
    %298 = vmatpush.bf16.msra.mxu0 %v268
    %299 = vmatpush.bf16.msra.mxu0 %v267
    %300 = vmatpush.bf16.msra.mxu0 %v266
    %301 = vmatpush.bf16.msra.mxu0 %v265
    %302 = vmatpush.bf16.msra.mxu0 %v264
    %303 = vmatpush.bf16.msra.mxu0 %v263
    %304 = vmatpush.bf16.msra.mxu0 %v262
    %305 = vmatpush.bf16.msra.mxu0 %v261
    %306 = vmatmul.bf16.gmra.mxu0 %v156
    %v307 = vpop.f32.mrf.mxu0
    %v308 = vadd.f32 %v295, %v307
    %v309 = vpop.f32.mrf.mxu0
    %310 = vdwg.mxu0
    %v311 = vadd.f32 %v136, %v308
    %312 = vst [vmem:[#allocation2] sm:$0xff] %v143
    %313 = vst [vmem:[#allocation3] sm:$0xff] %v147
    %314 = vst [vmem:[#allocation4] sm:$0xff] %v311
    %315 = vst [vmem:[#allocation5] sm:$0xff] %v149
    %316 = vst [vmem:[#allocation18] sm:$0xff] %v143
    // Predicated region
    $region54: #{tpu_custom_call.1} parent=1 // pred_check
      %p317 = pneg %p115
    $region55: #{tpu_custom_call.1} parent=1 // pred_check_branch
      %319 = sbr.rel (%p317) target = $region57
    $region56: #{tpu_custom_call.1} parent=1 // pred_region
      %320 = vst [vmem:[#allocation19] sm:$0xff] %v143
      %321 = vst [vmem:[#allocation21] sm:$0xff] %v147
      %322 = vst [vmem:[#allocation22] sm:$0xff] %v311
      %323 = vst [vmem:[#allocation24] sm:$0xff] %v149
    $region57: #{tpu_custom_call.1} parent=1 // pred_fallthru
      _
    // Predicated region
    $region58: #{tpu_custom_call.1} parent=1 // pred_check
      _
    $region59: #{tpu_custom_call.1} parent=1 // pred_check_branch
      %325 = sbr.rel (0) target = $region61
    $region60: #{tpu_custom_call.1} parent=1 // pred_region
      %327 = vsyncadd [#allocation9], 0
      %s329 = sshll.u32 [#allocation18], 4
      %s330 = int_to_ptr.vmem [resolvable:$true] %s329
      %s331 = sshll.u32 %s6, 4
      %s332 = int_to_ptr.hbm [resolvable:$true] %s331
      %334 = dma.vmem_to_hbm [thread:$0]  %s330, 128, %s332, [#allocation9]
    $region61: #{tpu_custom_call.1} parent=1 // pred_fallthru
      _
    // Predicated region
    $region62: #{tpu_custom_call.1} parent=1 // pred_check
      _
    $region63: #{tpu_custom_call.1} parent=1 // pred_check_branch
      %336 = sbr.rel (0) target = $region65
    $region64: #{tpu_custom_call.1} parent=1 // pred_region
      %338 = vsyncadd [#allocation20], 0
      %s340 = sshll.u32 [#allocation19], 4
      %s341 = int_to_ptr.vmem [resolvable:$true] %s340
      %s342 = sshll.u32 %s7, 4
      %s343 = int_to_ptr.hbm [resolvable:$true] %s342
      %345 = dma.vmem_to_hbm [thread:$0]  %s341, 128, %s343, [#allocation20]
    $region65: #{tpu_custom_call.1} parent=1 // pred_fallthru
      _
    // Predicated region
    $region66: #{tpu_custom_call.1} parent=1 // pred_check
      _
    $region67: #{tpu_custom_call.1} parent=1 // pred_check_branch
      %347 = sbr.rel (0) target = $region69
    $region68: #{tpu_custom_call.1} parent=1 // pred_region
      %349 = vsyncadd [#allocation20], 0
      %s351 = sshll.u32 [#allocation21], 4
      %s352 = int_to_ptr.vmem [resolvable:$true] %s351
      %s353 = sshll.u32 %s8, 4
      %s354 = int_to_ptr.hbm [resolvable:$true] %s353
      %356 = dma.vmem_to_hbm [thread:$0]  %s352, 128, %s354, [#allocation20]
    $region69: #{tpu_custom_call.1} parent=1 // pred_fallthru
      _
    // Predicated region
    $region70: #{tpu_custom_call.1} parent=1 // pred_check
      _
    $region71: #{tpu_custom_call.1} parent=1 // pred_check_branch
      %358 = sbr.rel (0) target = $region73
    $region72: #{tpu_custom_call.1} parent=1 // pred_region
      %360 = vsyncadd [#allocation23], 0
      %s362 = sshll.u32 [#allocation22], 4
      %s363 = int_to_ptr.vmem [resolvable:$true] %s362
      %s364 = sshll.u32 %s9, 4
      %s365 = int_to_ptr.hbm [resolvable:$true] %s364
      %367 = dma.vmem_to_hbm [thread:$0]  %s363, 128, %s365, [#allocation23]
    $region73: #{tpu_custom_call.1} parent=1 // pred_fallthru
      _
    // Predicated region
    $region74: #{tpu_custom_call.1} parent=1 // pred_check
      _
    $region75: #{tpu_custom_call.1} parent=1 // pred_check_branch
      %369 = sbr.rel (0) target = $region77
    $region76: #{tpu_custom_call.1} parent=1 // pred_region
      %371 = vsyncadd [#allocation23], 0
      %s373 = sshll.u32 [#allocation24], 4
      %s374 = int_to_ptr.vmem [resolvable:$true] %s373
      %s375 = sshll.u32 %s10, 4
      %s376 = int_to_ptr.hbm [resolvable:$true] %s375
      %378 = dma.vmem_to_hbm [thread:$0]  %s374, 128, %s376, [#allocation23]
    $region77: #{tpu_custom_call.1} parent=1 // pred_fallthru
      _
    // Predicated region
    $region78: #{tpu_custom_call.1} parent=1 // pred_check
      _
    $region79: #{tpu_custom_call.1} parent=1 // pred_check_branch
      %380 = sbr.rel (0) target = $region81
    $region80: #{tpu_custom_call.1} parent=1 // pred_region
      %382 = dma.done [#allocation9], 128
    $region81: #{tpu_custom_call.1} parent=1 // pred_fallthru
      _
    // Predicated region
    $region82: #{tpu_custom_call.1} parent=1 // pred_check
      _
    $region83: #{tpu_custom_call.1} parent=1 // pred_check_branch
      %384 = sbr.rel (0) target = $region85
    $region84: #{tpu_custom_call.1} parent=1 // pred_region
      %386 = dma.done [#allocation20], 128
    $region85: #{tpu_custom_call.1} parent=1 // pred_fallthru
      _
    // Predicated region
    $region86: #{tpu_custom_call.1} parent=1 // pred_check
      _
    $region87: #{tpu_custom_call.1} parent=1 // pred_check_branch
      %388 = sbr.rel (0) target = $region89
    $region88: #{tpu_custom_call.1} parent=1 // pred_region
      %390 = dma.done [#allocation20], 128
    $region89: #{tpu_custom_call.1} parent=1 // pred_fallthru
      _
    // Predicated region
    $region90: #{tpu_custom_call.1} parent=1 // pred_check
      _
    $region91: #{tpu_custom_call.1} parent=1 // pred_check_branch
      %392 = sbr.rel (0) target = $region93
    $region92: #{tpu_custom_call.1} parent=1 // pred_region
      %394 = dma.done [#allocation23], 128
    $region93: #{tpu_custom_call.1} parent=1 // pred_fallthru
      _
    // Predicated region
    $region94: #{tpu_custom_call.1} parent=1 // pred_check
      _
    $region95: #{tpu_custom_call.1} parent=1 // pred_check_branch
      %396 = sbr.rel (0) target = $region97
    $region96: #{tpu_custom_call.1} parent=1 // pred_region
      %398 = dma.done [#allocation23], 128
    $region97: #{tpu_custom_call.1} parent=1 // pred_fallthru
      _
    %399 = vsyncpa [#allocation8], 1
    %400 = vsyncpa [#allocation11], 1
    %401 = vsyncpa [#allocation14], 1
    %402 = vsyncpa [#allocation17], 1
    %403 = vsyncpa [#allocation9], 1
    %404 = vsyncpa [#allocation20], 1
    %405 = vsyncpa [#allocation23], 1

</llo_original>
